<compile_context>
chip_gen: v5e
topology: v5e:2x2
jax: 0.10.0
libtpu: 0.0.40
codegen_flags: <defaults>
</compile_context>

<pallas_src>
import functools

import jax
import jax.numpy as jnp
from jax.experimental import pallas as pl
from jax.experimental.pallas import tpu as pltpu

INPUT_SIZE = 108
HIDDEN_SIZE = 64
OUTPUT_SIZE = 3

# Lane/MXU friendly padded dims.  Column 108 of x carries the bias-fold "1";
# hidden lane 64 carries a constant 1 through ReLU for the fc2 bias fold.
PAD_IN = 128
PAD_HID = 128
PAD_OUT = 128

DEFAULT_BATCH_TILE = 8192  # rows per grid step; ~13 MiB double-buffered VMEM


def _mlp_kernel(x_ref, w1_ref, w2_ref, o_ref):
    # fc1 (+bias via augmented column): (TB,128)bf16 @ (128,128)bf16 -> f32.
    h = jnp.dot(x_ref[...], w1_ref[...], preferred_element_type=jnp.float32)
    h = jnp.maximum(h, 0.0)  # ReLU; constant-1 lane passes through unchanged.
    # fc2 (+bias via constant-1 hidden lane): bf16 operands, f32 accumulate.
    out = jnp.dot(h.astype(jnp.bfloat16), w2_ref[...],
                  preferred_element_type=jnp.float32)
    o_ref[...] = out.astype(o_ref.dtype)  # bf16 store, full 128-lane vst.


def _round_up(n, m):
    return ((n + m - 1) // m) * m


@functools.partial(jax.jit, static_argnames=("batch_tile",))
def mlp_forward(x, w1_t, b1, w2_t, b2, *, batch_tile=DEFAULT_BATCH_TILE):
    """x: (B, 108); w1_t: (108, 64); b1: (64,); w2_t: (64, 3); b2: (3,).

    Weights are stored pre-transposed relative to torch's (out, in) layout so
    the kernel computes plain row-major y = relu(x @ W1 + b1) @ W2 + b2.
    Returns (B, 3) in x.dtype.
    """
    B = x.shape[0]
    out_dtype = x.dtype

    # ---- padded weights with folded biases (exact zero padding) ------------
    w1_p = jnp.zeros((PAD_IN, PAD_HID), jnp.float32)
    w1_p = w1_p.at[:INPUT_SIZE, :HIDDEN_SIZE].set(w1_t)
    w1_p = w1_p.at[INPUT_SIZE, :HIDDEN_SIZE].set(b1)   # fc1 bias fold
    w1_p = w1_p.at[INPUT_SIZE, HIDDEN_SIZE].set(1.0)   # constant-1 hidden lane

    w2_p = jnp.zeros((PAD_HID, PAD_OUT), jnp.float32)
    w2_p = w2_p.at[:HIDDEN_SIZE, :OUTPUT_SIZE].set(w2_t)
    w2_p = w2_p.at[HIDDEN_SIZE, :OUTPUT_SIZE].set(b2)  # fc2 bias fold

    w1_bf = w1_p.astype(jnp.bfloat16)
    w2_bf = w2_p.astype(jnp.bfloat16)

    # ---- batch tiling -------------------------------------------------------
    Bp = _round_up(B, 8)
    if Bp <= 16:
        tb = Bp                                   # too small to split usefully
    elif Bp <= batch_tile:
        tb = _round_up((Bp + 1) // 2, 8)          # 2 balanced tiles -> v7x 2 TCs
        Bp = 2 * tb
    else:
        tb = batch_tile
        Bp = _round_up(Bp, tb)

    # ---- fused pad + bf16 cast of x (single pass, no f32 intermediate) ------
    x_bf = jnp.zeros((Bp, PAD_IN), jnp.bfloat16)
    x_bf = x_bf.at[:B, :INPUT_SIZE].set(x.astype(jnp.bfloat16))
    x_bf = x_bf.at[:, INPUT_SIZE].set(jnp.bfloat16(1.0))  # bias-fold column

    grid = (Bp // tb,)

    out_padded = pl.pallas_call(
        _mlp_kernel,
        out_shape=jax.ShapeDtypeStruct((Bp, PAD_OUT), jnp.bfloat16),
        grid=grid,
        in_specs=[
            pl.BlockSpec((tb, PAD_IN), lambda i: (i, 0)),        # x: batch-tiled
            pl.BlockSpec((PAD_IN, PAD_HID), lambda i: (0, 0)),   # w1 (+b1): resident
            pl.BlockSpec((PAD_HID, PAD_OUT), lambda i: (0, 0)),  # w2 (+b2): resident
        ],
        out_specs=pl.BlockSpec((tb, PAD_OUT), lambda i: (i, 0)),
        compiler_params=pltpu.CompilerParams(
            dimension_semantics=("parallel",),
            vmem_limit_bytes=32 * 1024 * 1024,  # explicit; tb=8192 needs ~13 MiB
        ),
    )(x_bf, w1_bf, w2_bf)

    # Padded rows / lanes carry garbage (ReLU(b1)@w2+b2); slice them off.
    return out_padded[:B, :OUTPUT_SIZE].astype(out_dtype)


def init_params(key):
    """Deterministic init mimicking nn.Linear's uniform(-1/sqrt(fan_in), 1/sqrt(fan_in))."""
    k1, k2, k3, k4 = jax.random.split(key, 4)
    bound1 = 1.0 / jnp.sqrt(jnp.float32(INPUT_SIZE))
    bound2 = 1.0 / jnp.sqrt(jnp.float32(HIDDEN_SIZE))
    # Stored transposed relative to torch's (out, in) layout: (in, out).
    w1_t = jax.random.uniform(k1, (INPUT_SIZE, HIDDEN_SIZE), jnp.float32, -bound1, bound1)
    b1 = jax.random.uniform(k2, (HIDDEN_SIZE,), jnp.float32, -bound1, bound1)
    w2_t = jax.random.uniform(k3, (HIDDEN_SIZE, OUTPUT_SIZE), jnp.float32, -bound2, bound2)
    b2 = jax.random.uniform(k4, (OUTPUT_SIZE,), jnp.float32, -bound2, bound2)
    return w1_t, b1, w2_t, b2


def _reference_f32(x, w1_t, b1, w2_t, b2):
    return jnp.maximum(x @ w1_t + b1[None, :], 0.0) @ w2_t + b2[None, :]


def _reference_bf16(x, w1_t, b1, w2_t, b2):
    # Same bf16-operand / f32-accumulate recipe as the kernel (bias fold incl.).
    h = jnp.dot(x.astype(jnp.bfloat16), w1_t.astype(jnp.bfloat16),
                preferred_element_type=jnp.float32)
    h = h + b1.astype(jnp.bfloat16).astype(jnp.float32)[None, :]
    h = jnp.maximum(h, 0.0)
    out = jnp.dot(h.astype(jnp.bfloat16), w2_t.astype(jnp.bfloat16),
                  preferred_element_type=jnp.float32)
    return out + b2.astype(jnp.bfloat16).astype(jnp.float32)[None, :]


if __name__ == "__main__":
    key = jax.random.PRNGKey(0)
    kx, kp, kx2 = jax.random.split(key, 3)
    w1_t, b1, w2_t, b2 = init_params(kp)

    # --- small batch (matches the original module usage) ---
    B = 8
    x = jax.random.normal(kx, (B, INPUT_SIZE), jnp.float32)
    out = jax.block_until_ready(mlp_forward(x, w1_t, b1, w2_t, b2))
    assert out.shape == (B, OUTPUT_SIZE)
    ref_bf = _reference_bf16(x, w1_t, b1, w2_t, b2)
    ref_f32 = _reference_f32(x, w1_t, b1, w2_t, b2)
    assert jnp.allclose(out, ref_bf, atol=1e-2, rtol=1e-2)
    assert jnp.allclose(out, ref_f32, atol=5e-2, rtol=5e-2)

    # --- exercise the multi-block grid + ragged-batch padding path ---
    B2 = 300
    x2 = jax.random.normal(kx2, (B2, INPUT_SIZE), jnp.float32)
    # default tile -> two balanced grid steps (v7x megacore path)
    out2 = jax.block_until_ready(mlp_forward(x2, w1_t, b1, w2_t, b2))
    # small forced tile -> 3-step grid with batch padding
    out3 = jax.block_until_ready(mlp_forward(x2, w1_t, b1, w2_t, b2, batch_tile=128))
    assert out2.shape == (B2, OUTPUT_SIZE) and out3.shape == (B2, OUTPUT_SIZE)
    ref2_bf = _reference_bf16(x2, w1_t, b1, w2_t, b2)
    assert jnp.allclose(out2, ref2_bf, atol=1e-2, rtol=1e-2)
    assert jnp.allclose(out3, ref2_bf, atol=1e-2, rtol=1e-2)

    print("KERNEL_OK")
</pallas_src>

<mosaic_0001>
module attributes {stable_mosaic.version = 11 : i64} {
  func.func @_mlp_kernel(%arg0: i32, %arg1: memref<8x128xbf16, #tpu.memory_space<vmem>>, %arg2: memref<128x128xbf16, #tpu.memory_space<vmem>>, %arg3: memref<128x128xbf16, #tpu.memory_space<vmem>>, %arg4: memref<8x128xbf16, #tpu.memory_space<vmem>>) attributes {dimension_semantics = [#tpu.dimension_semantics<parallel>], iteration_bounds = array<i64: 1>, scalar_prefetch = 0 : i64, scratch_operands = 0 : i64, tpu.core_type = #tpu.core_type<tc>, window_params = [{transform_indices = @transform_0, window_bounds = array<i64: 8, 128>}, {pipeline_mode = #tpu.pipeline_mode<synchronous>, transform_indices = @transform_1, window_bounds = array<i64: 128, 128>}, {pipeline_mode = #tpu.pipeline_mode<synchronous>, transform_indices = @transform_2, window_bounds = array<i64: 128, 128>}, {transform_indices = @transform_3, window_bounds = array<i64: 8, 128>}]} {
    %c0 = arith.constant 0 : index
    %c0_0 = arith.constant 0 : index
    %0 = vector.load %arg1[%c0, %c0_0] : memref<8x128xbf16, #tpu.memory_space<vmem>>, vector<8x128xbf16>
    %c0_1 = arith.constant 0 : index
    %c0_2 = arith.constant 0 : index
    %1 = vector.load %arg2[%c0_1, %c0_2] : memref<128x128xbf16, #tpu.memory_space<vmem>>, vector<128x128xbf16>
    %cst = arith.constant dense<0.000000e+00> : vector<8x128xf32>
    %2 = tpu.matmul %0, %1, %cst {dimension_numbers = #tpu.dot_dimension_numbers<[1], [0], [0], [1], [0, 0, 1, 1], [], []>} : vector<8x128xbf16>, vector<128x128xbf16>, vector<8x128xf32> -> vector<8x128xf32>
    %cst_3 = arith.constant 0.000000e+00 : f32
    %3 = vector.broadcast %cst_3 : f32 to vector<8x128xf32>
    %4 = arith.maximumf %2, %3 : vector<8x128xf32>
    %5 = arith.truncf %4 : vector<8x128xf32> to vector<8x128xbf16>
    %c0_4 = arith.constant 0 : index
    %c0_5 = arith.constant 0 : index
    %6 = vector.load %arg3[%c0_4, %c0_5] : memref<128x128xbf16, #tpu.memory_space<vmem>>, vector<128x128xbf16>
    %cst_6 = arith.constant dense<0.000000e+00> : vector<8x128xf32>
    %7 = tpu.matmul %5, %6, %cst_6 {dimension_numbers = #tpu.dot_dimension_numbers<[1], [0], [0], [1], [0, 0, 1, 1], [], []>} : vector<8x128xbf16>, vector<128x128xbf16>, vector<8x128xf32> -> vector<8x128xf32>
    %8 = arith.truncf %7 : vector<8x128xf32> to vector<8x128xbf16>
    %c0_7 = arith.constant 0 : index
    %c0_8 = arith.constant 0 : index
    %9 = vector.load %arg4[%c0_7, %c0_8] : memref<8x128xbf16, #tpu.memory_space<vmem>>, vector<8x128xbf16>
    tpu.vector_store %arg4[%c0_7, %c0_8], %8 {strides = array<i32>} : memref<8x128xbf16, #tpu.memory_space<vmem>>, vector<8x128xbf16>,
    return
  }
  func.func @transform_0(%arg0: i32) -> (i32, i32) {
    %c0_i32 = arith.constant 0 : i32
    %c0_i32_0 = arith.constant 0 : i32
    return %arg0, %c0_i32 : i32, i32
  }
  func.func @transform_1(%arg0: i32) -> (i32, i32) {
    %c0_i32 = arith.constant 0 : i32
    %c0_i32_0 = arith.constant 0 : i32
    %c0_i32_1 = arith.constant 0 : i32
    return %c0_i32, %c0_i32_0 : i32, i32
  }
  func.func @transform_2(%arg0: i32) -> (i32, i32) {
    %c0_i32 = arith.constant 0 : i32
    %c0_i32_0 = arith.constant 0 : i32
    %c0_i32_1 = arith.constant 0 : i32
    return %c0_i32, %c0_i32_0 : i32, i32
  }
  func.func @transform_3(%arg0: i32) -> (i32, i32) {
    %c0_i32 = arith.constant 0 : i32
    %c0_i32_0 = arith.constant 0 : i32
    return %arg0, %c0_i32 : i32, i32
  }
}

</mosaic_0001>

<llo_original>
// kernel: mlp_forward.1
$region0: #{mlp_forward.1}
  #allocation0 [shape = 'u32[]', space=smem, size = 0x4, offset = 0x4, fixed_abs, tag = 'smem constant byte address 0x4 - core index']
  #allocation1 [shape = 'u32[72,128]{1,0:T(1,128)}', space=vmem, size = 0x9000, scoped, tag = 'internal scratch']
  %s0 = inlined_call_operand.vmem [shape: bf16[8,128], index: 0, kind: input, shape index: {}]
  %s1 = inlined_call_operand.vmem [shape: bf16[128,128], index: 1, kind: input, shape index: {}]
  %s2 = inlined_call_operand.vmem [shape: bf16[128,128], index: 2, kind: input, shape index: {}]
  %s3 = inlined_call_operand.vmem [shape: bf16[8,128], index: 3, kind: output, shape index: {}]
  %s4 = sld [smem:[#allocation0]]
  $region22: #{mlp_forward.1} parent=0
    _
  %s6 = ssub.s32 1, %s4
  %s7 = scalar_select 0, %s6, %s4
  // Predicated region
  $region2: #{mlp_forward.1} parent=0 // pred_check
    _
  $region3: #{mlp_forward.1} parent=0 // pred_check_branch
    %9 = sbr.rel (0) target = $region5
  $region4: #{mlp_forward.1} parent=0 // pred_region
    _
  $region5: #{mlp_forward.1} parent=0 // pred_fallthru
    _
  // Predicated region
  $region6: #{mlp_forward.1} parent=0 // pred_check
    _
  $region7: #{mlp_forward.1} parent=0 // pred_check_branch
    %11 = sbr.rel (0) target = $region9
  $region8: #{mlp_forward.1} parent=0 // pred_region
    _
  $region9: #{mlp_forward.1} parent=0 // pred_fallthru
    _
  // Predicated region
  $region10: #{mlp_forward.1} parent=0 // pred_check
    _
  $region11: #{mlp_forward.1} parent=0 // pred_check_branch
    %13 = sbr.rel (0) target = $region13
  $region12: #{mlp_forward.1} parent=0 // pred_region
    _
  $region13: #{mlp_forward.1} parent=0 // pred_fallthru
    _
  %v14 = vld [vmem:[%s0] sm:$0xf]
  %v15 = vld [vmem:[%s1] sm:$0xf]
  %v16 = vld [vmem:[%s1 + $0x4] sm:$0xf]
  %v17 = vld [vmem:[%s1 + $0x8] sm:$0xf]
  %v18 = vld [vmem:[%s1 + $0xc] sm:$0xf]
  %v19 = vld [vmem:[%s1 + $0x10] sm:$0xf]
  %v20 = vld [vmem:[%s1 + $0x14] sm:$0xf]
  %v21 = vld [vmem:[%s1 + $0x18] sm:$0xf]
  %v22 = vld [vmem:[%s1 + $0x1c] sm:$0xf]
  %v23 = vld [vmem:[%s1 + $0x20] sm:$0xf]
  %v24 = vld [vmem:[%s1 + $0x24] sm:$0xf]
  %v25 = vld [vmem:[%s1 + $0x28] sm:$0xf]
  %v26 = vld [vmem:[%s1 + $0x2c] sm:$0xf]
  %v27 = vld [vmem:[%s1 + $0x30] sm:$0xf]
  %v28 = vld [vmem:[%s1 + $0x34] sm:$0xf]
  %v29 = vld [vmem:[%s1 + $0x38] sm:$0xf]
  %v30 = vld [vmem:[%s1 + $0x3c] sm:$0xf]
  %v47 = vunpack.c.l.b16 %v15
  %v48 = vunpack.c.l.b16 %v16
  %v49 = vunpack.c.l.b16 %v17
  %v50 = vunpack.c.l.b16 %v18
  %v51 = vunpack.c.l.b16 %v19
  %v52 = vunpack.c.l.b16 %v20
  %v53 = vunpack.c.l.b16 %v21
  %v54 = vunpack.c.l.b16 %v22
  %v55 = vunpack.c.l.b16 %v23
  %v56 = vunpack.c.l.b16 %v24
  %v57 = vunpack.c.l.b16 %v25
  %v58 = vunpack.c.l.b16 %v26
  %v59 = vunpack.c.l.b16 %v27
  %v60 = vunpack.c.l.b16 %v28
  %v61 = vunpack.c.l.b16 %v29
  %v62 = vunpack.c.l.b16 %v30
  %v63 = vpack.c.b16 %v48, %v47
  %v64 = vpack.c.b16 %v50, %v49
  %v65 = vpack.c.b16 %v52, %v51
  %v66 = vpack.c.b16 %v54, %v53
  %v67 = vpack.c.b16 %v56, %v55
  %v68 = vpack.c.b16 %v58, %v57
  %v69 = vpack.c.b16 %v60, %v59
  %v70 = vpack.c.b16 %v62, %v61
  %79 = vmatpush.bf16.msra.mxu0 %v70
  %80 = vmatpush.bf16.msra.mxu0 %v69
  %81 = vmatpush.bf16.msra.mxu0 %v68
  %82 = vmatpush.bf16.msra.mxu0 %v67
  %83 = vmatpush.bf16.msra.mxu0 %v66
  %84 = vmatpush.bf16.msra.mxu0 %v65
  %85 = vmatpush.bf16.msra.mxu0 %v64
  %86 = vmatpush.bf16.msra.mxu0 %v63
  %87 = vmatmul.bf16.gmra.mxu0 %v14
  %v88 = vpop.f32.mrf.mxu0
  %v89 = vadd.f32 0.0, %v88
  %v90 = vpop.f32.mrf.mxu0
  %91 = vdwg.mxu0
  %v92 = vmax.f32 %v89, 0.0
  %v93 = vpack.c.bf16 %v92, %v92
  %v94 = vld [vmem:[%s2] sm:$0xf]
  %v95 = vld [vmem:[%s2 + $0x4] sm:$0xf]
  %v96 = vld [vmem:[%s2 + $0x8] sm:$0xf]
  %v97 = vld [vmem:[%s2 + $0xc] sm:$0xf]
  %v98 = vld [vmem:[%s2 + $0x10] sm:$0xf]
  %v99 = vld [vmem:[%s2 + $0x14] sm:$0xf]
  %v100 = vld [vmem:[%s2 + $0x18] sm:$0xf]
  %v101 = vld [vmem:[%s2 + $0x1c] sm:$0xf]
  %v102 = vld [vmem:[%s2 + $0x20] sm:$0xf]
  %v103 = vld [vmem:[%s2 + $0x24] sm:$0xf]
  %v104 = vld [vmem:[%s2 + $0x28] sm:$0xf]
  %v105 = vld [vmem:[%s2 + $0x2c] sm:$0xf]
  %v106 = vld [vmem:[%s2 + $0x30] sm:$0xf]
  %v107 = vld [vmem:[%s2 + $0x34] sm:$0xf]
  %v108 = vld [vmem:[%s2 + $0x38] sm:$0xf]
  %v109 = vld [vmem:[%s2 + $0x3c] sm:$0xf]
  %v126 = vunpack.c.l.b16 %v94
  %v127 = vunpack.c.l.b16 %v95
  %v128 = vunpack.c.l.b16 %v96
  %v129 = vunpack.c.l.b16 %v97
  %v130 = vunpack.c.l.b16 %v98
  %v131 = vunpack.c.l.b16 %v99
  %v132 = vunpack.c.l.b16 %v100
  %v133 = vunpack.c.l.b16 %v101
  %v134 = vunpack.c.l.b16 %v102
  %v135 = vunpack.c.l.b16 %v103
  %v136 = vunpack.c.l.b16 %v104
  %v137 = vunpack.c.l.b16 %v105
  %v138 = vunpack.c.l.b16 %v106
  %v139 = vunpack.c.l.b16 %v107
  %v140 = vunpack.c.l.b16 %v108
  %v141 = vunpack.c.l.b16 %v109
  %v142 = vpack.c.b16 %v127, %v126
  %v143 = vpack.c.b16 %v129, %v128
  %v144 = vpack.c.b16 %v131, %v130
  %v145 = vpack.c.b16 %v133, %v132
  %v146 = vpack.c.b16 %v135, %v134
  %v147 = vpack.c.b16 %v137, %v136
  %v148 = vpack.c.b16 %v139, %v138
  %v149 = vpack.c.b16 %v141, %v140
  %158 = vmatpush.bf16.msra.mxu0 %v149
  %159 = vmatpush.bf16.msra.mxu0 %v148
  %160 = vmatpush.bf16.msra.mxu0 %v147
  %161 = vmatpush.bf16.msra.mxu0 %v146
  %162 = vmatpush.bf16.msra.mxu0 %v145
  %163 = vmatpush.bf16.msra.mxu0 %v144
  %164 = vmatpush.bf16.msra.mxu0 %v143
  %165 = vmatpush.bf16.msra.mxu0 %v142
  %166 = vmatmul.bf16.gmra.mxu0 %v93
  %v167 = vpop.f32.mrf.mxu0
  %v168 = vadd.f32 0.0, %v167
  %v169 = vpop.f32.mrf.mxu0
  %170 = vdwg.mxu0
  %v171 = vpack.c.bf16 %v168, %v168
  %172 = vst [vmem:[%s3] sm:$0xf] %v171
  // Predicated region
  $region14: #{mlp_forward.1} parent=0 // pred_check
    _
  $region15: #{mlp_forward.1} parent=0 // pred_check_branch
    %174 = sbr.rel (0) target = $region17
  $region16: #{mlp_forward.1} parent=0 // pred_region
    _
  $region17: #{mlp_forward.1} parent=0 // pred_fallthru
    _
  // Predicated region
  $region18: #{mlp_forward.1} parent=0 // pred_check
    _
  $region19: #{mlp_forward.1} parent=0 // pred_check_branch
    %176 = sbr.rel (0) target = $region21
  $region20: #{mlp_forward.1} parent=0 // pred_region
    _
  $region21: #{mlp_forward.1} parent=0 // pred_fallthru
    _

</llo_original>
